<compile_context>
chip_gen: v5e
topology: v5e:2x2
jax: 0.10.0
libtpu: 0.0.40
codegen_flags: <defaults>
</compile_context>

<pallas_src>
import functools

import jax
import jax.numpy as jnp
from jax.experimental import pallas as pl
from jax.experimental.pallas import tpu as pltpu


def _mha_kernel(x_ref, w_ref, o_ref, *, heads, feat, fp, temperature):
    H, F, Fp = heads, feat, fp
    Bblk, T, _ = x_ref.shape
    BT = Bblk * T

    w_all = w_ref[...]                                   # (F+1, 3*H*Fp) bf16
    w = w_all[:F, :]                                     # weight rows
    bias = w_all[F:F + 1, :].astype(jnp.float32)         # fused bias row

    # One fused, lane-dense projection for q / k / (v @ Wproj) of all heads.
    #   columns [      h*Fp :       h*Fp + F]  -> q, head h
    #   columns [(H + h)*Fp : (H + h)*Fp + F]  -> k, head h
    #   columns [(2H+ h)*Fp : (2H+ h)*Fp + F]  -> v @ Wproj, head h
    # (padding columns are zero, so padded contractions are exact).
    x = x_ref[...].reshape(BT, F).astype(jnp.bfloat16)
    qkv = jnp.dot(x, w, preferred_element_type=jnp.float32) + bias   # (BT, 3*H*Fp) f32
    qkv = qkv.reshape(Bblk, T, 3 * H * Fp).astype(jnp.bfloat16)

    # Scores for all heads (each einsum batched over the batch dim), then one
    # fused numerically-stable softmax over the stacked (H, B, T, T) tensor.
    inv_scale = 1.0 / (float(F) * float(temperature))    # q/sqrt(F) * k/sqrt(F) / temp
    scores = []
    for h in range(H):                                   # unrolled, H is small
        qh = qkv[:, :, h * Fp:(h + 1) * Fp]              # (B, T, Fp), tile-aligned view
        kh = qkv[:, :, (H + h) * Fp:(H + h + 1) * Fp]
        s = jnp.einsum('btf,bsf->bts', qh, kh, preferred_element_type=jnp.float32)
        scores.append(s * inv_scale)
    s_all = jnp.stack(scores, axis=0)                    # (H, B, T, T) f32
    s_all = s_all - jnp.max(s_all, axis=-1, keepdims=True)
    p = jnp.exp(s_all)
    attn = (p * pl.reciprocal(jnp.sum(p, axis=-1, keepdims=True), approx=False)
            ).astype(jnp.bfloat16)                       # (H, B, T, T)

    # attn @ (v @ Wproj), accumulated over heads.  The output projection and
    # its bias were folded into the weights host-side, so this IS the output.
    out = jnp.zeros((Bblk, T, Fp), jnp.float32)
    for h in range(H):
        voh = qkv[:, :, (2 * H + h) * Fp:(2 * H + h + 1) * Fp]       # (B, T, Fp)
        out = out + jnp.einsum('bts,bsf->btf', attn[h], voh,
                               preferred_element_type=jnp.float32)

    o_ref[...] = out[:, :, :F].astype(o_ref.dtype)


def _prepare_fused_weights(w_qkv, b_qkv, w_proj, b_proj, *, heads, feat, fp):
    """Build the single fused, per-head-padded, bias-augmented bf16 weight."""
    H, F, Fp = heads, feat, fp
    # PyTorch nn.Linear(F, 3*H*F): weight (3*H*F, F_in), out index (h*F + f)*3 + c.
    w_r = w_qkv.reshape(H, F, 3, F)                      # [h, f_out, c, f_in]
    b_r = b_qkv.reshape(H, F, 3)
    wq = jnp.transpose(w_r[:, :, 0, :], (0, 2, 1))       # (H, F_in, F)
    wk = jnp.transpose(w_r[:, :, 1, :], (0, 2, 1))
    wv = jnp.transpose(w_r[:, :, 2, :], (0, 2, 1))
    bq, bk, bv = b_r[:, :, 0], b_r[:, :, 1], b_r[:, :, 2]            # (H, F)

    # nn.Linear(H*F, F): weight (F_out, H*F); per-head slab -> (H, F, F_out).
    wp = jnp.transpose(w_proj.reshape(F, H, F), (1, 2, 0))
    # Fold V into the output projection (no nonlinearity in between).
    wvo = jnp.einsum('hif,hfo->hio', wv, wp)             # (H, F_in, F_out)
    # Fold the v-bias and proj-bias into one output bias (softmax rows sum to 1).
    b_out = b_proj + jnp.einsum('hf,hfo->o', bv, wp)     # (F_out,)

    pad3 = ((0, 0), (0, 0), (0, Fp - F))
    w_sections = jnp.concatenate(
        [jnp.pad(wq, pad3), jnp.pad(wk, pad3), jnp.pad(wvo, pad3)], axis=0)  # (3H, F_in, Fp)
    w_big = jnp.transpose(w_sections, (1, 0, 2)).reshape(F, 3 * H * Fp)

    pad2 = ((0, 0), (0, Fp - F))
    bias_row = jnp.concatenate(
        [jnp.pad(bq, pad2), jnp.pad(bk, pad2),
         jnp.zeros((H, Fp), b_out.dtype).at[0, :F].set(b_out)], axis=0)      # (3H, Fp)
    bias_row = bias_row.reshape(1, 3 * H * Fp)

    return jnp.concatenate([w_big, bias_row], axis=0).astype(jnp.bfloat16)  # (F+1, 3H*Fp)


def multihead_attention(x, w_qkv, b_qkv, w_proj, b_proj, *, heads, temperature,
                        batch_blocks=1):
    """x: [B, T, F] float32.
       w_qkv: [3*H*F, F], b_qkv: [3*H*F]   (PyTorch nn.Linear(F, H*F*3) layout)
       w_proj: [F, H*F],  b_proj: [F]      (PyTorch nn.Linear(H*F, F) layout)
       batch_blocks: grid steps over the batch dim (1 for v5e/v6e; 2 on v7x)."""
    B, T, F = x.shape
    H = heads
    Fp = ((F + 127) // 128) * 128            # per-head width padded to a lane tile
    assert B % batch_blocks == 0
    b_blk = B // batch_blocks

    w_aug = _prepare_fused_weights(w_qkv, b_qkv, w_proj, b_proj,
                                   heads=H, feat=F, fp=Fp)       # (F+1, 3*H*Fp) bf16

    kernel = functools.partial(_mha_kernel, heads=H, feat=F, fp=Fp,
                               temperature=float(temperature))

    return pl.pallas_call(
        kernel,
        out_shape=jax.ShapeDtypeStruct((B, T, F), x.dtype),
        grid_spec=pltpu.PrefetchScalarGridSpec(
            num_scalar_prefetch=0,
            grid=(batch_blocks,),
            in_specs=[
                pl.BlockSpec((b_blk, T, F), lambda i: (i, 0, 0)),           # x
                pl.BlockSpec((F + 1, 3 * H * Fp), lambda i: (0, 0)),        # fused W (resident)
            ],
            out_specs=pl.BlockSpec((b_blk, T, F), lambda i: (i, 0, 0)),
        ),
        compiler_params=pltpu.CompilerParams(
            dimension_semantics=("parallel",)),
    )(x, w_aug)


def reference_forward(x, w_qkv, b_qkv, w_proj, b_proj, *, heads, temperature):
    """Plain-JAX transliteration of the PyTorch forward (for validation)."""
    B, T, F = x.shape
    qkv = x @ w_qkv.T + b_qkv                                  # (B, T, 3*H*F)
    qkv = qkv.reshape(B, T, heads, F, 3)
    qkv = jnp.transpose(qkv, (0, 2, 1, 3, 4)).reshape(B * heads, T, F, 3)
    scale = F ** 0.5
    q = qkv[..., 0] / scale
    k = qkv[..., 1] / scale
    v = qkv[..., 2]
    w = jax.nn.softmax(jnp.einsum('btf,bsf->bts', q, k) / temperature, axis=2)
    o = jnp.einsum('bts,bsf->btf', w, v).reshape(B, heads, T, F)
    o = jnp.transpose(o, (0, 2, 1, 3)).reshape(B, T, heads * F)
    return o @ w_proj.T + b_proj


if __name__ == "__main__":
    B, T, F, H = 2, 8, 32, 4            # batch, seq (x_dim*y_dim), in_features, heads
    temperature = 2.0

    key = jax.random.PRNGKey(0)
    kx, k1, k2, k3, k4 = jax.random.split(key, 5)

    x = jax.random.normal(kx, (B, T, F), dtype=jnp.float32)
    w_qkv = 0.1 * jax.random.normal(k1, (3 * H * F, F), dtype=jnp.float32)
    b_qkv = 0.1 * jax.random.normal(k2, (3 * H * F,), dtype=jnp.float32)
    w_proj = 0.1 * jax.random.normal(k3, (F, H * F), dtype=jnp.float32)
    b_proj = 0.1 * jax.random.normal(k4, (F,), dtype=jnp.float32)

    out = multihead_attention(x, w_qkv, b_qkv, w_proj, b_proj,
                              heads=H, temperature=temperature)
    out = jax.block_until_ready(out)

    ref = reference_forward(x, w_qkv, b_qkv, w_proj, b_proj,
                            heads=H, temperature=temperature)
    assert out.shape == (B, T, F)
    assert jnp.allclose(out, ref, atol=2e-2, rtol=2e-2), (
        f"max abs diff {jnp.max(jnp.abs(out - ref))}")

    print("KERNEL_OK")
</pallas_src>

<mosaic_0001>
module attributes {stable_mosaic.version = 11 : i64} {
  func.func @_mha_kernel(%arg0: i32, %arg1: memref<2x8x32xf32, #tpu.memory_space<vmem>>, %arg2: memref<33x1536xbf16, #tpu.memory_space<vmem>>, %arg3: memref<2x8x32xf32, #tpu.memory_space<vmem>>) attributes {dimension_semantics = [#tpu.dimension_semantics<parallel>], iteration_bounds = array<i64: 1>, scalar_prefetch = 0 : i64, scratch_operands = 0 : i64, tpu.core_type = #tpu.core_type<tc>, window_params = [{transform_indices = @transform_0, window_bounds = array<i64: 2, 8, 32>}, {pipeline_mode = #tpu.pipeline_mode<synchronous>, transform_indices = @transform_1, window_bounds = array<i64: 33, 1536>}, {transform_indices = @transform_2, window_bounds = array<i64: 2, 8, 32>}]} {
    %c0 = arith.constant 0 : index
    %c0_0 = arith.constant 0 : index
    %0 = vector.load %arg2[%c0, %c0_0] : memref<33x1536xbf16, #tpu.memory_space<vmem>>, vector<33x1536xbf16>
    %1 = vector.extract_strided_slice %0 {offsets = [0, 0], sizes = [32, 1536], strides = [1, 1]} : vector<33x1536xbf16> to vector<32x1536xbf16>
    %2 = vector.extract_strided_slice %0 {offsets = [32, 0], sizes = [1, 1536], strides = [1, 1]} : vector<33x1536xbf16> to vector<1x1536xbf16>
    %3 = arith.extf %2 : vector<1x1536xbf16> to vector<1x1536xf32>
    %c0_1 = arith.constant 0 : index
    %c0_2 = arith.constant 0 : index
    %c0_3 = arith.constant 0 : index
    %4 = vector.load %arg1[%c0_1, %c0_2, %c0_3] : memref<2x8x32xf32, #tpu.memory_space<vmem>>, vector<2x8x32xf32>
    %5 = vector.shape_cast %4 : vector<2x8x32xf32> to vector<16x32xf32>
    %6 = arith.truncf %5 : vector<16x32xf32> to vector<16x32xbf16>
    %cst = arith.constant dense<0.000000e+00> : vector<16x1536xf32>
    %7 = tpu.matmul %6, %1, %cst {dimension_numbers = #tpu.dot_dimension_numbers<[1], [0], [0], [1], [0, 0, 1, 1], [], []>} : vector<16x32xbf16>, vector<32x1536xbf16>, vector<16x1536xf32> -> vector<16x1536xf32>
    %8 = vector.broadcast %3 : vector<1x1536xf32> to vector<16x1536xf32>
    %9 = arith.addf %7, %8 : vector<16x1536xf32>
    %10 = vector.shape_cast %9 : vector<16x1536xf32> to vector<2x8x1536xf32>
    %11 = arith.truncf %10 : vector<2x8x1536xf32> to vector<2x8x1536xbf16>
    %12 = vector.extract_strided_slice %11 {offsets = [0, 0, 0], sizes = [2, 8, 128], strides = [1, 1, 1]} : vector<2x8x1536xbf16> to vector<2x8x128xbf16>
    %13 = vector.extract_strided_slice %11 {offsets = [0, 0, 512], sizes = [2, 8, 128], strides = [1, 1, 1]} : vector<2x8x1536xbf16> to vector<2x8x128xbf16>
    "tpu.trace_start"() <{level = 10 : i32, message = "btf,bsf->bts"}> : () -> ()
    %cst_4 = arith.constant dense<0.000000e+00> : vector<2x8x8xf32>
    %14 = tpu.matmul %12, %13, %cst_4 {dimension_numbers = #tpu.dot_dimension_numbers<[2], [2], [1], [1], [0, 0, 0, 1, 1, 1], [0], [0]>} : vector<2x8x128xbf16>, vector<2x8x128xbf16>, vector<2x8x8xf32> -> vector<2x8x8xf32>
    "tpu.trace_stop"() : () -> ()
    %cst_5 = arith.constant 1.562500e-02 : f32
    %15 = vector.broadcast %cst_5 : f32 to vector<2x8x8xf32>
    %16 = arith.mulf %14, %15 : vector<2x8x8xf32>
    %17 = vector.extract_strided_slice %11 {offsets = [0, 0, 128], sizes = [2, 8, 128], strides = [1, 1, 1]} : vector<2x8x1536xbf16> to vector<2x8x128xbf16>
    %18 = vector.extract_strided_slice %11 {offsets = [0, 0, 640], sizes = [2, 8, 128], strides = [1, 1, 1]} : vector<2x8x1536xbf16> to vector<2x8x128xbf16>
    "tpu.trace_start"() <{level = 10 : i32, message = "btf,bsf->bts"}> : () -> ()
    %cst_6 = arith.constant dense<0.000000e+00> : vector<2x8x8xf32>
    %19 = tpu.matmul %17, %18, %cst_6 {dimension_numbers = #tpu.dot_dimension_numbers<[2], [2], [1], [1], [0, 0, 0, 1, 1, 1], [0], [0]>} : vector<2x8x128xbf16>, vector<2x8x128xbf16>, vector<2x8x8xf32> -> vector<2x8x8xf32>
    "tpu.trace_stop"() : () -> ()
    %cst_7 = arith.constant 1.562500e-02 : f32
    %20 = vector.broadcast %cst_7 : f32 to vector<2x8x8xf32>
    %21 = arith.mulf %19, %20 : vector<2x8x8xf32>
    %22 = vector.extract_strided_slice %11 {offsets = [0, 0, 256], sizes = [2, 8, 128], strides = [1, 1, 1]} : vector<2x8x1536xbf16> to vector<2x8x128xbf16>
    %23 = vector.extract_strided_slice %11 {offsets = [0, 0, 768], sizes = [2, 8, 128], strides = [1, 1, 1]} : vector<2x8x1536xbf16> to vector<2x8x128xbf16>
    "tpu.trace_start"() <{level = 10 : i32, message = "btf,bsf->bts"}> : () -> ()
    %cst_8 = arith.constant dense<0.000000e+00> : vector<2x8x8xf32>
    %24 = tpu.matmul %22, %23, %cst_8 {dimension_numbers = #tpu.dot_dimension_numbers<[2], [2], [1], [1], [0, 0, 0, 1, 1, 1], [0], [0]>} : vector<2x8x128xbf16>, vector<2x8x128xbf16>, vector<2x8x8xf32> -> vector<2x8x8xf32>
    "tpu.trace_stop"() : () -> ()
    %cst_9 = arith.constant 1.562500e-02 : f32
    %25 = vector.broadcast %cst_9 : f32 to vector<2x8x8xf32>
    %26 = arith.mulf %24, %25 : vector<2x8x8xf32>
    %27 = vector.extract_strided_slice %11 {offsets = [0, 0, 384], sizes = [2, 8, 128], strides = [1, 1, 1]} : vector<2x8x1536xbf16> to vector<2x8x128xbf16>
    %28 = vector.extract_strided_slice %11 {offsets = [0, 0, 896], sizes = [2, 8, 128], strides = [1, 1, 1]} : vector<2x8x1536xbf16> to vector<2x8x128xbf16>
    "tpu.trace_start"() <{level = 10 : i32, message = "btf,bsf->bts"}> : () -> ()
    %cst_10 = arith.constant dense<0.000000e+00> : vector<2x8x8xf32>
    %29 = tpu.matmul %27, %28, %cst_10 {dimension_numbers = #tpu.dot_dimension_numbers<[2], [2], [1], [1], [0, 0, 0, 1, 1, 1], [0], [0]>} : vector<2x8x128xbf16>, vector<2x8x128xbf16>, vector<2x8x8xf32> -> vector<2x8x8xf32>
    "tpu.trace_stop"() : () -> ()
    %cst_11 = arith.constant 1.562500e-02 : f32
    %30 = vector.broadcast %cst_11 : f32 to vector<2x8x8xf32>
    %31 = arith.mulf %29, %30 : vector<2x8x8xf32>
    %32 = vector.shape_cast %16 : vector<2x8x8xf32> to vector<1x2x8x8xf32>
    %33 = vector.shape_cast %21 : vector<2x8x8xf32> to vector<1x2x8x8xf32>
    %34 = vector.shape_cast %26 : vector<2x8x8xf32> to vector<1x2x8x8xf32>
    %35 = vector.shape_cast %31 : vector<2x8x8xf32> to vector<1x2x8x8xf32>
    %36 = tpu.concatenate %32, %33, %34, %35 in 0 : vector<1x2x8x8xf32>, vector<1x2x8x8xf32>, vector<1x2x8x8xf32>, vector<1x2x8x8xf32> -> vector<4x2x8x8xf32>
    %cst_12 = arith.constant dense<0xFF800000> : vector<4x2x8xf32>
    %37 = vector.multi_reduction <maximumf>, %36, %cst_12 [3] : vector<4x2x8x8xf32> to vector<4x2x8xf32>
    %38 = vector.shape_cast %37 : vector<4x2x8xf32> to vector<4x2x8x1xf32>
    %39 = vector.broadcast %38 : vector<4x2x8x1xf32> to vector<4x2x8x8xf32>
    %40 = arith.subf %36, %39 : vector<4x2x8x8xf32>
    %41 = math.exp %40 : vector<4x2x8x8xf32>
    %cst_13 = arith.constant dense<0.000000e+00> : vector<4x2x8xf32>
    %42 = vector.multi_reduction <add>, %41, %cst_13 [3] : vector<4x2x8x8xf32> to vector<4x2x8xf32>
    %43 = vector.shape_cast %42 : vector<4x2x8xf32> to vector<4x2x8x1xf32>
    %44 = tpu.reciprocal %43 : vector<4x2x8x1xf32> -> vector<4x2x8x1xf32>
    %45 = vector.broadcast %44 : vector<4x2x8x1xf32> to vector<4x2x8x8xf32>
    %46 = arith.mulf %41, %45 : vector<4x2x8x8xf32>
    %47 = arith.truncf %46 : vector<4x2x8x8xf32> to vector<4x2x8x8xbf16>
    %cst_14 = arith.constant 0.000000e+00 : f32
    %48 = vector.broadcast %cst_14 : f32 to vector<2x8x128xf32>
    %49 = vector.extract_strided_slice %11 {offsets = [0, 0, 1024], sizes = [2, 8, 128], strides = [1, 1, 1]} : vector<2x8x1536xbf16> to vector<2x8x128xbf16>
    %50 = vector.extract_strided_slice %47 {offsets = [0, 0, 0, 0], sizes = [1, 2, 8, 8], strides = [1, 1, 1, 1]} : vector<4x2x8x8xbf16> to vector<1x2x8x8xbf16>
    %51 = vector.shape_cast %50 : vector<1x2x8x8xbf16> to vector<2x8x8xbf16>
    "tpu.trace_start"() <{level = 10 : i32, message = "bts,bsf->btf"}> : () -> ()
    %cst_15 = arith.constant dense<0.000000e+00> : vector<2x8x128xf32>
    %52 = tpu.matmul %51, %49, %cst_15 {dimension_numbers = #tpu.dot_dimension_numbers<[2], [1], [1], [2], [0, 0, 0, 1, 1, 2], [0], [0]>} : vector<2x8x8xbf16>, vector<2x8x128xbf16>, vector<2x8x128xf32> -> vector<2x8x128xf32>
    "tpu.trace_stop"() : () -> ()
    %53 = arith.addf %48, %52 : vector<2x8x128xf32>
    %54 = vector.extract_strided_slice %11 {offsets = [0, 0, 1152], sizes = [2, 8, 128], strides = [1, 1, 1]} : vector<2x8x1536xbf16> to vector<2x8x128xbf16>
    %55 = vector.extract_strided_slice %47 {offsets = [1, 0, 0, 0], sizes = [1, 2, 8, 8], strides = [1, 1, 1, 1]} : vector<4x2x8x8xbf16> to vector<1x2x8x8xbf16>
    %56 = vector.shape_cast %55 : vector<1x2x8x8xbf16> to vector<2x8x8xbf16>
    "tpu.trace_start"() <{level = 10 : i32, message = "bts,bsf->btf"}> : () -> ()
    %cst_16 = arith.constant dense<0.000000e+00> : vector<2x8x128xf32>
    %57 = tpu.matmul %56, %54, %cst_16 {dimension_numbers = #tpu.dot_dimension_numbers<[2], [1], [1], [2], [0, 0, 0, 1, 1, 2], [0], [0]>} : vector<2x8x8xbf16>, vector<2x8x128xbf16>, vector<2x8x128xf32> -> vector<2x8x128xf32>
    "tpu.trace_stop"() : () -> ()
    %58 = arith.addf %53, %57 : vector<2x8x128xf32>
    %59 = vector.extract_strided_slice %11 {offsets = [0, 0, 1280], sizes = [2, 8, 128], strides = [1, 1, 1]} : vector<2x8x1536xbf16> to vector<2x8x128xbf16>
    %60 = vector.extract_strided_slice %47 {offsets = [2, 0, 0, 0], sizes = [1, 2, 8, 8], strides = [1, 1, 1, 1]} : vector<4x2x8x8xbf16> to vector<1x2x8x8xbf16>
    %61 = vector.shape_cast %60 : vector<1x2x8x8xbf16> to vector<2x8x8xbf16>
    "tpu.trace_start"() <{level = 10 : i32, message = "bts,bsf->btf"}> : () -> ()
    %cst_17 = arith.constant dense<0.000000e+00> : vector<2x8x128xf32>
    %62 = tpu.matmul %61, %59, %cst_17 {dimension_numbers = #tpu.dot_dimension_numbers<[2], [1], [1], [2], [0, 0, 0, 1, 1, 2], [0], [0]>} : vector<2x8x8xbf16>, vector<2x8x128xbf16>, vector<2x8x128xf32> -> vector<2x8x128xf32>
    "tpu.trace_stop"() : () -> ()
    %63 = arith.addf %58, %62 : vector<2x8x128xf32>
    %64 = vector.extract_strided_slice %11 {offsets = [0, 0, 1408], sizes = [2, 8, 128], strides = [1, 1, 1]} : vector<2x8x1536xbf16> to vector<2x8x128xbf16>
    %65 = vector.extract_strided_slice %47 {offsets = [3, 0, 0, 0], sizes = [1, 2, 8, 8], strides = [1, 1, 1, 1]} : vector<4x2x8x8xbf16> to vector<1x2x8x8xbf16>
    %66 = vector.shape_cast %65 : vector<1x2x8x8xbf16> to vector<2x8x8xbf16>
    "tpu.trace_start"() <{level = 10 : i32, message = "bts,bsf->btf"}> : () -> ()
    %cst_18 = arith.constant dense<0.000000e+00> : vector<2x8x128xf32>
    %67 = tpu.matmul %66, %64, %cst_18 {dimension_numbers = #tpu.dot_dimension_numbers<[2], [1], [1], [2], [0, 0, 0, 1, 1, 2], [0], [0]>} : vector<2x8x8xbf16>, vector<2x8x128xbf16>, vector<2x8x128xf32> -> vector<2x8x128xf32>
    "tpu.trace_stop"() : () -> ()
    %68 = arith.addf %63, %67 : vector<2x8x128xf32>
    %69 = vector.extract_strided_slice %68 {offsets = [0, 0, 0], sizes = [2, 8, 32], strides = [1, 1, 1]} : vector<2x8x128xf32> to vector<2x8x32xf32>
    %c0_19 = arith.constant 0 : index
    %c0_20 = arith.constant 0 : index
    %c0_21 = arith.constant 0 : index
    %70 = vector.load %arg3[%c0_19, %c0_20, %c0_21] : memref<2x8x32xf32, #tpu.memory_space<vmem>>, vector<2x8x32xf32>
    tpu.vector_store %arg3[%c0_19, %c0_20, %c0_21], %69 {strides = array<i32>} : memref<2x8x32xf32, #tpu.memory_space<vmem>>, vector<2x8x32xf32>,
    return
  }
  func.func @transform_0(%arg0: i32) -> (i32, i32, i32) {
    %c0_i32 = arith.constant 0 : i32
    %c0_i32_0 = arith.constant 0 : i32
    %c0_i32_1 = arith.constant 0 : i32
    return %arg0, %c0_i32, %c0_i32_0 : i32, i32, i32
  }
  func.func @transform_1(%arg0: i32) -> (i32, i32) {
    %c0_i32 = arith.constant 0 : i32
    %c0_i32_0 = arith.constant 0 : i32
    %c0_i32_1 = arith.constant 0 : i32
    return %c0_i32, %c0_i32_0 : i32, i32
  }
  func.func @transform_2(%arg0: i32) -> (i32, i32, i32) {
    %c0_i32 = arith.constant 0 : i32
    %c0_i32_0 = arith.constant 0 : i32
    %c0_i32_1 = arith.constant 0 : i32
    return %arg0, %c0_i32, %c0_i32_0 : i32, i32, i32
  }
}

</mosaic_0001>

<llo_original>
// kernel: tpu_custom_call.1
$region0: #{tpu_custom_call.1}
  #allocation0 [shape = 'u32[]', space=smem, size = 0x4, offset = 0x4, fixed_abs, tag = 'smem constant byte address 0x4 - core index']
  #allocation1 [shape = 'u32[72,128]{1,0:T(1,128)}', space=vmem, size = 0x9000, scoped, tag = 'internal scratch']
  %s0 = inlined_call_operand.hbm [shape: f32[2,8,32], index: 0, kind: input, shape index: {}]
  %s1 = inlined_call_operand.hbm [shape: bf16[33,1536], index: 1, kind: input, shape index: {}]
  %s2 = inlined_call_operand.hbm [shape: f32[2,8,32], index: 2, kind: output, shape index: {}]
  %s3 = sld [smem:[#allocation0]]
  $region26: #{tpu_custom_call.1} parent=0
    _
  %s5 = ssub.s32 1, %s3
  %s6 = scalar_select 0, %s5, %s3
  $region1: #{tpu_custom_call.1} parent=0
    #allocation2 [shape = 'u8[8192]{0}', space=vmem, size = 0x2000, scoped, tag = 'input window, operand 0, single buffered']
    #allocation3 [shape = 's32[1]{0}', space=sflag, size = 0x4, scoped, tag = 'scoped memory for tpu_custom_call.1']
    #allocation4 [shape = 's32[1]{0}', space=sflag, size = 0x4, scoped, tag = 'scoped memory for tpu_custom_call.1']
    #allocation5 [shape = 'u8[122880]{0}', space=vmem, size = 0x1e000, scoped, tag = 'input window, operand 1, single buffered']
    #allocation6 [shape = 's32[1]{0}', space=sflag, size = 0x4, scoped, tag = 'scoped memory for tpu_custom_call.1']
    #allocation7 [shape = 'u8[8192]{0}', space=vmem, size = 0x2000, scoped, tag = 'output window, operand 0, single buffered']
    %7 = vsyncpa [#allocation3], 0
    %8 = vsyncpa [#allocation6], 0
    %9 = vsyncpa [#allocation4], 0
    // Predicated region
    $region2: #{tpu_custom_call.1} parent=1 // pred_check
      _
    $region3: #{tpu_custom_call.1} parent=1 // pred_check_branch
      %11 = sbr.rel (0) target = $region5
    $region4: #{tpu_custom_call.1} parent=1 // pred_region
      %13 = vsyncadd [#allocation3], 0
      %s14 = sshll.u32 %s0, 4
      %s15 = int_to_ptr.hbm [resolvable:$true] %s14
      %s16 = sshll.u32 [#allocation2], 4
      %s17 = int_to_ptr.vmem [resolvable:$true] %s16
      %22 = dma.hbm_to_vmem [thread:$0]  %s15, 256, %s17, [#allocation3], 128, 128, 8
    $region5: #{tpu_custom_call.1} parent=1 // pred_fallthru
      _
    // Predicated region
    $region6: #{tpu_custom_call.1} parent=1 // pred_check
      _
    $region7: #{tpu_custom_call.1} parent=1 // pred_check_branch
      %24 = sbr.rel (0) target = $region9
    $region8: #{tpu_custom_call.1} parent=1 // pred_region
      %26 = vsyncadd [#allocation6], 0
      %s27 = sshll.u32 %s1, 4
      %s28 = int_to_ptr.hbm [resolvable:$true] %s27
      %s29 = sshll.u32 [#allocation5], 4
      %s30 = int_to_ptr.vmem [resolvable:$true] %s29
      %35 = dma.hbm_to_vmem [thread:$0]  %s28, 3840, %s30, [#allocation6], 768, 768, 48
    $region9: #{tpu_custom_call.1} parent=1 // pred_fallthru
      _
    // Predicated region
    $region10: #{tpu_custom_call.1} parent=1 // pred_check
      _
    $region11: #{tpu_custom_call.1} parent=1 // pred_check_branch
      %37 = sbr.rel (0) target = $region13
    $region12: #{tpu_custom_call.1} parent=1 // pred_region
      %39 = dma.done [#allocation3], 256
    $region13: #{tpu_custom_call.1} parent=1 // pred_fallthru
      _
    // Predicated region
    $region14: #{tpu_custom_call.1} parent=1 // pred_check
      _
    $region15: #{tpu_custom_call.1} parent=1 // pred_check_branch
      %41 = sbr.rel (0) target = $region17
    $region16: #{tpu_custom_call.1} parent=1 // pred_region
      %43 = dma.done [#allocation6], 3840
    $region17: #{tpu_custom_call.1} parent=1 // pred_fallthru
      _
    %v45 = vld [vmem:[#allocation5] sm:$0xff]
    %v46 = vld [vmem:[#allocation5 + $0x8] sm:$0xff]
    %v47 = vld [vmem:[#allocation5 + $0x10] sm:$0xff]
    %v48 = vld [vmem:[#allocation5 + $0x18] sm:$0xff]
    %v49 = vld [vmem:[#allocation5 + $0x20] sm:$0xff]
    %v50 = vld [vmem:[#allocation5 + $0x28] sm:$0xff]
    %v51 = vld [vmem:[#allocation5 + $0x30] sm:$0xff]
    %v52 = vld [vmem:[#allocation5 + $0x38] sm:$0xff]
    %v53 = vld [vmem:[#allocation5 + $0x40] sm:$0xff]
    %v54 = vld [vmem:[#allocation5 + $0x48] sm:$0xff]
    %v55 = vld [vmem:[#allocation5 + $0x50] sm:$0xff]
    %v56 = vld [vmem:[#allocation5 + $0x58] sm:$0xff]
    %v57 = vld [vmem:[#allocation5 + $0x60] sm:$0xff]
    %v58 = vld [vmem:[#allocation5 + $0x68] sm:$0xff]
    %v59 = vld [vmem:[#allocation5 + $0x70] sm:$0xff]
    %v60 = vld [vmem:[#allocation5 + $0x78] sm:$0xff]
    %v61 = vld [vmem:[#allocation5 + $0x80] sm:$0xff]
    %v62 = vld [vmem:[#allocation5 + $0x88] sm:$0xff]
    %v63 = vld [vmem:[#allocation5 + $0x90] sm:$0xff]
    %v64 = vld [vmem:[#allocation5 + $0x98] sm:$0xff]
    %v65 = vld [vmem:[#allocation5 + $0xa0] sm:$0xff]
    %v66 = vld [vmem:[#allocation5 + $0xa8] sm:$0xff]
    %v67 = vld [vmem:[#allocation5 + $0xb0] sm:$0xff]
    %v68 = vld [vmem:[#allocation5 + $0xb8] sm:$0xff]
    %v69 = vld [vmem:[#allocation5 + $0xc0] sm:$0x11]
    %v70 = vld [vmem:[#allocation5 + $0xc8] sm:$0x11]
    %v71 = vld [vmem:[#allocation5 + $0xd0] sm:$0x11]
    %v72 = vld [vmem:[#allocation5 + $0xd8] sm:$0x11]
    %v73 = vld [vmem:[#allocation5 + $0xe0] sm:$0x11]
    %v74 = vld [vmem:[#allocation5 + $0xe8] sm:$0x11]
    %v75 = vunpack.c.l.bf16 %v69
    %v76 = vunpack.c.h.bf16 %v69
    %v77 = vunpack.c.l.bf16 %v70
    %v78 = vunpack.c.h.bf16 %v70
    %v79 = vunpack.c.l.bf16 %v71
    %v80 = vunpack.c.h.bf16 %v71
    %v81 = vunpack.c.l.bf16 %v72
    %v82 = vunpack.c.h.bf16 %v72
    %v83 = vunpack.c.l.bf16 %v73
    %v84 = vunpack.c.h.bf16 %v73
    %v85 = vunpack.c.l.bf16 %v74
    %v86 = vunpack.c.h.bf16 %v74
    %v87 = vld [vmem:[#allocation2] sm:$0xff]
    %v88 = vld [vmem:[#allocation2 + $0x8] sm:$0xff]
    %v89 = vpack.c.bf16 %v88, %v87
    %v90 = vperm.slane %v75, 0
    %v91 = vperm.slane %v76, 0
    %v92 = vperm.slane %v77, 0
    %v93 = vperm.slane %v78, 0
    %v94 = vperm.slane %v79, 0
    %v95 = vperm.slane %v80, 0
    %v96 = vperm.slane %v81, 0
    %v97 = vperm.slane %v82, 0
    %v98 = vperm.slane %v83, 0
    %v99 = vperm.slane %v84, 0
    %v100 = vperm.slane %v85, 0
    %v101 = vperm.slane %v86, 0
    %v126 = vunpack.c.l.b16 %v45
    %v127 = vunpack.c.h.b16 %v45
    %v128 = vunpack.c.l.b16 %v46
    %v129 = vunpack.c.h.b16 %v46
    %v130 = vunpack.c.l.b16 %v47
    %v131 = vunpack.c.h.b16 %v47
    %v132 = vunpack.c.l.b16 %v48
    %v133 = vunpack.c.h.b16 %v48
    %v134 = vunpack.c.l.b16 %v49
    %v135 = vunpack.c.h.b16 %v49
    %v136 = vunpack.c.l.b16 %v50
    %v137 = vunpack.c.h.b16 %v50
    %v138 = vunpack.c.l.b16 %v51
    %v139 = vunpack.c.h.b16 %v51
    %v140 = vunpack.c.l.b16 %v52
    %v141 = vunpack.c.h.b16 %v52
    %v142 = vunpack.c.l.b16 %v53
    %v143 = vunpack.c.h.b16 %v53
    %v144 = vunpack.c.l.b16 %v54
    %v145 = vunpack.c.h.b16 %v54
    %v146 = vunpack.c.l.b16 %v55
    %v147 = vunpack.c.h.b16 %v55
    %v148 = vunpack.c.l.b16 %v56
    %v149 = vunpack.c.h.b16 %v56
    %v150 = vunpack.c.l.b16 %v57
    %v151 = vunpack.c.h.b16 %v57
    %v152 = vunpack.c.l.b16 %v58
    %v153 = vunpack.c.h.b16 %v58
    %v154 = vunpack.c.l.b16 %v59
    %v155 = vunpack.c.h.b16 %v59
    %v156 = vunpack.c.l.b16 %v60
    %v157 = vunpack.c.h.b16 %v60
    %v158 = vunpack.c.l.b16 %v61
    %v159 = vunpack.c.h.b16 %v61
    %v160 = vunpack.c.l.b16 %v62
    %v161 = vunpack.c.h.b16 %v62
    %v162 = vunpack.c.l.b16 %v63
    %v163 = vunpack.c.h.b16 %v63
    %v164 = vunpack.c.l.b16 %v64
    %v165 = vunpack.c.h.b16 %v64
    %v166 = vunpack.c.l.b16 %v65
    %v167 = vunpack.c.h.b16 %v65
    %v168 = vunpack.c.l.b16 %v66
    %v169 = vunpack.c.h.b16 %v66
    %v170 = vunpack.c.l.b16 %v67
    %v171 = vunpack.c.h.b16 %v67
    %v172 = vunpack.c.l.b16 %v68
    %v173 = vunpack.c.h.b16 %v68
    %v174 = vpack.c.b16 %v138, %v126
    %v175 = vpack.c.b16 %v139, %v127
    %v176 = vpack.c.b16 %v140, %v128
    %v177 = vpack.c.b16 %v141, %v129
    %v178 = vpack.c.b16 %v142, %v130
    %v179 = vpack.c.b16 %v143, %v131
    %v180 = vpack.c.b16 %v144, %v132
    %v181 = vpack.c.b16 %v145, %v133
    %v182 = vpack.c.b16 %v146, %v134
    %v183 = vpack.c.b16 %v147, %v135
    %v184 = vpack.c.b16 %v148, %v136
    %v185 = vpack.c.b16 %v149, %v137
    %v186 = vpack.c.b16 %v162, %v150
    %v187 = vpack.c.b16 %v163, %v151
    %v188 = vpack.c.b16 %v164, %v152
    %v189 = vpack.c.b16 %v165, %v153
    %v190 = vpack.c.b16 %v166, %v154
    %v191 = vpack.c.b16 %v167, %v155
    %v192 = vpack.c.b16 %v168, %v156
    %v193 = vpack.c.b16 %v169, %v157
    %v194 = vpack.c.b16 %v170, %v158
    %v195 = vpack.c.b16 %v171, %v159
    %v196 = vpack.c.b16 %v172, %v160
    %v197 = vpack.c.b16 %v173, %v161
    %vm222 = vcmask 261120
    %v224 = vsel %vm222, %v89, 0
    %226 = vmatpush.bf16.msra.mxu0 0
    %227 = vmatpush.bf16.msra.mxu0 0
    %228 = vmatpush.bf16.msra.mxu0 0
    %229 = vmatpush.bf16.msra.mxu0 0
    %230 = vmatpush.bf16.msra.mxu0 0
    %231 = vmatpush.bf16.msra.mxu0 0
    %232 = vmatpush.bf16.msra.mxu0 %v186
    %233 = vmatpush.bf16.msra.mxu0 %v174
    %234 = vmatmul.bf16.gmra.mxu0 %v224
    %v235 = vpop.f32.mrf.mxu0
    %v236 = vadd.f32 %v90, %v235
    %v237 = vpop.f32.mrf.mxu0
    %v238 = vadd.f32 %v90, %v237
    %239 = vdwg.mxu0
    %240 = vmatpush.bf16.msra.mxu0 0
    %241 = vmatpush.bf16.msra.mxu0 0
    %242 = vmatpush.bf16.msra.mxu0 0
    %243 = vmatpush.bf16.msra.mxu0 0
    %244 = vmatpush.bf16.msra.mxu0 0
    %245 = vmatpush.bf16.msra.mxu0 0
    %246 = vmatpush.bf16.msra.mxu0 %v187
    %247 = vmatpush.bf16.msra.mxu0 %v175
    %248 = vmatmul.bf16.gmra.mxu0 %v224
    %v249 = vpop.f32.mrf.mxu0
    %v250 = vadd.f32 %v91, %v249
    %v251 = vpop.f32.mrf.mxu0
    %v252 = vadd.f32 %v91, %v251
    %253 = vdwg.mxu0
    %254 = vmatpush.bf16.msra.mxu0 0
    %255 = vmatpush.bf16.msra.mxu0 0
    %256 = vmatpush.bf16.msra.mxu0 0
    %257 = vmatpush.bf16.msra.mxu0 0
    %258 = vmatpush.bf16.msra.mxu0 0
    %259 = vmatpush.bf16.msra.mxu0 0
    %260 = vmatpush.bf16.msra.mxu0 %v188
    %261 = vmatpush.bf16.msra.mxu0 %v176
    %262 = vmatmul.bf16.gmra.mxu0 %v224
    %v263 = vpop.f32.mrf.mxu0
    %v264 = vadd.f32 %v92, %v263
    %v265 = vpop.f32.mrf.mxu0
    %v266 = vadd.f32 %v92, %v265
    %267 = vdwg.mxu0
    %268 = vmatpush.bf16.msra.mxu0 0
    %269 = vmatpush.bf16.msra.mxu0 0
    %270 = vmatpush.bf16.msra.mxu0 0
    %271 = vmatpush.bf16.msra.mxu0 0
    %272 = vmatpush.bf16.msra.mxu0 0
    %273 = vmatpush.bf16.msra.mxu0 0
    %274 = vmatpush.bf16.msra.mxu0 %v189
    %275 = vmatpush.bf16.msra.mxu0 %v177
    %276 = vmatmul.bf16.gmra.mxu0 %v224
    %v277 = vpop.f32.mrf.mxu0
    %v278 = vadd.f32 %v93, %v277
    %v279 = vpop.f32.mrf.mxu0
    %v280 = vadd.f32 %v93, %v279
    %281 = vdwg.mxu0
    %282 = vmatpush.bf16.msra.mxu0 0
    %283 = vmatpush.bf16.msra.mxu0 0
    %284 = vmatpush.bf16.msra.mxu0 0
    %285 = vmatpush.bf16.msra.mxu0 0
    %286 = vmatpush.bf16.msra.mxu0 0
    %287 = vmatpush.bf16.msra.mxu0 0
    %288 = vmatpush.bf16.msra.mxu0 %v190
    %289 = vmatpush.bf16.msra.mxu0 %v178
    %290 = vmatmul.bf16.gmra.mxu0 %v224
    %v291 = vpop.f32.mrf.mxu0
    %v292 = vadd.f32 %v94, %v291
    %v293 = vpop.f32.mrf.mxu0
    %v294 = vadd.f32 %v94, %v293
    %295 = vdwg.mxu0
    %296 = vmatpush.bf16.msra.mxu0 0
    %297 = vmatpush.bf16.msra.mxu0 0
    %298 = vmatpush.bf16.msra.mxu0 0
    %299 = vmatpush.bf16.msra.mxu0 0
    %300 = vmatpush.bf16.msra.mxu0 0
    %301 = vmatpush.bf16.msra.mxu0 0
    %302 = vmatpush.bf16.msra.mxu0 %v191
    %303 = vmatpush.bf16.msra.mxu0 %v179
    %304 = vmatmul.bf16.gmra.mxu0 %v224
    %v305 = vpop.f32.mrf.mxu0
    %v306 = vadd.f32 %v95, %v305
    %v307 = vpop.f32.mrf.mxu0
    %v308 = vadd.f32 %v95, %v307
    %309 = vdwg.mxu0
    %310 = vmatpush.bf16.msra.mxu0 0
    %311 = vmatpush.bf16.msra.mxu0 0
    %312 = vmatpush.bf16.msra.mxu0 0
    %313 = vmatpush.bf16.msra.mxu0 0
    %314 = vmatpush.bf16.msra.mxu0 0
    %315 = vmatpush.bf16.msra.mxu0 0
    %316 = vmatpush.bf16.msra.mxu0 %v192
    %317 = vmatpush.bf16.msra.mxu0 %v180
    %318 = vmatmul.bf16.gmra.mxu0 %v224
    %v319 = vpop.f32.mrf.mxu0
    %v320 = vadd.f32 %v96, %v319
    %v321 = vpop.f32.mrf.mxu0
    %v322 = vadd.f32 %v96, %v321
    %323 = vdwg.mxu0
    %324 = vmatpush.bf16.msra.mxu0 0
    %325 = vmatpush.bf16.msra.mxu0 0
    %326 = vmatpush.bf16.msra.mxu0 0
    %327 = vmatpush.bf16.msra.mxu0 0
    %328 = vmatpush.bf16.msra.mxu0 0
    %329 = vmatpush.bf16.msra.mxu0 0
    %330 = vmatpush.bf16.msra.mxu0 %v193
    %331 = vmatpush.bf16.msra.mxu0 %v181
    %332 = vmatmul.bf16.gmra.mxu0 %v224
    %v333 = vpop.f32.mrf.mxu0
    %v334 = vadd.f32 %v97, %v333
    %v335 = vpop.f32.mrf.mxu0
    %v336 = vadd.f32 %v97, %v335
    %337 = vdwg.mxu0
    %338 = vmatpush.bf16.msra.mxu0 0
    %339 = vmatpush.bf16.msra.mxu0 0
    %340 = vmatpush.bf16.msra.mxu0 0
    %341 = vmatpush.bf16.msra.mxu0 0
    %342 = vmatpush.bf16.msra.mxu0 0
    %343 = vmatpush.bf16.msra.mxu0 0
    %344 = vmatpush.bf16.msra.mxu0 %v194
    %345 = vmatpush.bf16.msra.mxu0 %v182
    %346 = vmatmul.bf16.gmra.mxu0 %v224
    %v347 = vpop.f32.mrf.mxu0
    %v348 = vadd.f32 %v98, %v347
    %v349 = vpop.f32.mrf.mxu0
    %v350 = vadd.f32 %v98, %v349
    %351 = vdwg.mxu0
    %352 = vmatpush.bf16.msra.mxu0 0
    %353 = vmatpush.bf16.msra.mxu0 0
    %354 = vmatpush.bf16.msra.mxu0 0
    %355 = vmatpush.bf16.msra.mxu0 0
    %356 = vmatpush.bf16.msra.mxu0 0
    %357 = vmatpush.bf16.msra.mxu0 0
    %358 = vmatpush.bf16.msra.mxu0 %v195
    %359 = vmatpush.bf16.msra.mxu0 %v183
    %360 = vmatmul.bf16.gmra.mxu0 %v224
    %v361 = vpop.f32.mrf.mxu0
    %v362 = vadd.f32 %v99, %v361
    %v363 = vpop.f32.mrf.mxu0
    %v364 = vadd.f32 %v99, %v363
    %365 = vdwg.mxu0
    %366 = vmatpush.bf16.msra.mxu0 0
    %367 = vmatpush.bf16.msra.mxu0 0
    %368 = vmatpush.bf16.msra.mxu0 0
    %369 = vmatpush.bf16.msra.mxu0 0
    %370 = vmatpush.bf16.msra.mxu0 0
    %371 = vmatpush.bf16.msra.mxu0 0
    %372 = vmatpush.bf16.msra.mxu0 %v196
    %373 = vmatpush.bf16.msra.mxu0 %v184
    %374 = vmatmul.bf16.gmra.mxu0 %v224
    %v375 = vpop.f32.mrf.mxu0
    %v376 = vadd.f32 %v100, %v375
    %v377 = vpop.f32.mrf.mxu0
    %v378 = vadd.f32 %v100, %v377
    %379 = vdwg.mxu0
    %380 = vmatpush.bf16.msra.mxu0 0
    %381 = vmatpush.bf16.msra.mxu0 0
    %382 = vmatpush.bf16.msra.mxu0 0
    %383 = vmatpush.bf16.msra.mxu0 0
    %384 = vmatpush.bf16.msra.mxu0 0
    %385 = vmatpush.bf16.msra.mxu0 0
    %386 = vmatpush.bf16.msra.mxu0 %v197
    %387 = vmatpush.bf16.msra.mxu0 %v185
    %388 = vmatmul.bf16.gmra.mxu0 %v224
    %v389 = vpop.f32.mrf.mxu0
    %v390 = vadd.f32 %v101, %v389
    %v391 = vpop.f32.mrf.mxu0
    %v392 = vadd.f32 %v101, %v391
    %393 = vdwg.mxu0
    %v394 = vpack.c.bf16 %v250, %v236
    %v395 = vpack.c.bf16 %v278, %v264
    %v396 = vpack.c.bf16 %v306, %v292
    %v397 = vpack.c.bf16 %v334, %v320
    %v398 = vpack.c.bf16 %v362, %v348
    %v399 = vpack.c.bf16 %v390, %v376
    %v400 = vpack.c.bf16 %v252, %v238
    %v401 = vpack.c.bf16 %v280, %v266
    %v402 = vpack.c.bf16 %v308, %v294
    %v403 = vpack.c.bf16 %v336, %v322
    %v404 = vpack.c.bf16 %v364, %v350
    %v405 = vpack.c.bf16 %v392, %v378
    %406 = vmatpush.bf16.xpose.msra.mxu0 0
    %407 = vmatpush.bf16.xpose.msra.mxu0 0
    %408 = vmatpush.bf16.xpose.msra.mxu0 0
    %409 = vmatpush.bf16.xpose.msra.mxu0 0
    %410 = vmatpush.bf16.xpose.msra.mxu0 0
    %411 = vmatpush.bf16.xpose.msra.mxu0 0
    %412 = vmatpush.bf16.xpose.msra.mxu0 0
    %413 = vmatpush.bf16.xpose.msra.mxu0 %v396
    %414 = vmatmul.bf16.gmra.mxu0 %v394
    %v415 = vpop.f32.mrf.mxu0
    %v416 = vadd.f32 0.0, %v415
    %v417 = vpop.f32.mrf.mxu0
    %418 = vdwg.mxu0
    %419 = vmatpush.bf16.xpose.msra.mxu0 0
    %420 = vmatpush.bf16.xpose.msra.mxu0 0
    %421 = vmatpush.bf16.xpose.msra.mxu0 0
    %422 = vmatpush.bf16.xpose.msra.mxu0 0
    %423 = vmatpush.bf16.xpose.msra.mxu0 0
    %424 = vmatpush.bf16.xpose.msra.mxu0 0
    %425 = vmatpush.bf16.xpose.msra.mxu0 0
    %426 = vmatpush.bf16.xpose.msra.mxu0 %v402
    %427 = vmatmul.bf16.gmra.mxu0 %v400
    %v428 = vpop.f32.mrf.mxu0
    %v429 = vadd.f32 0.0, %v428
    %v430 = vpop.f32.mrf.mxu0
    %431 = vdwg.mxu0
    %v432 = vmul.f32 %v416, 0.015625
    %v433 = vmul.f32 %v429, 0.015625
    %v435 = vrot.slane %v394, 4
    %v438 = vrot.slane %v396, 4
    %440 = vmatpush.bf16.xpose.msra.mxu0 0
    %441 = vmatpush.bf16.xpose.msra.mxu0 0
    %442 = vmatpush.bf16.xpose.msra.mxu0 0
    %443 = vmatpush.bf16.xpose.msra.mxu0 0
    %444 = vmatpush.bf16.xpose.msra.mxu0 0
    %445 = vmatpush.bf16.xpose.msra.mxu0 0
    %446 = vmatpush.bf16.xpose.msra.mxu0 0
    %447 = vmatpush.bf16.xpose.msra.mxu0 %v438
    %448 = vmatmul.bf16.gmra.mxu0 %v435
    %v449 = vpop.f32.mrf.mxu0
    %v450 = vadd.f32 0.0, %v449
    %v451 = vpop.f32.mrf.mxu0
    %452 = vdwg.mxu0
    %v454 = vrot.slane %v400, 4
    %v457 = vrot.slane %v402, 4
    %459 = vmatpush.bf16.xpose.msra.mxu0 0
    %460 = vmatpush.bf16.xpose.msra.mxu0 0
    %461 = vmatpush.bf16.xpose.msra.mxu0 0
    %462 = vmatpush.bf16.xpose.msra.mxu0 0
    %463 = vmatpush.bf16.xpose.msra.mxu0 0
    %464 = vmatpush.bf16.xpose.msra.mxu0 0
    %465 = vmatpush.bf16.xpose.msra.mxu0 0
    %466 = vmatpush.bf16.xpose.msra.mxu0 %v457
    %467 = vmatmul.bf16.gmra.mxu0 %v454
    %v468 = vpop.f32.mrf.mxu0
    %v469 = vadd.f32 0.0, %v468
    %v470 = vpop.f32.mrf.mxu0
    %471 = vdwg.mxu0
    %v472 = vmul.f32 %v450, 0.015625
    %v473 = vmul.f32 %v469, 0.015625
    %474 = vmatpush.bf16.xpose.msra.mxu0 0
    %475 = vmatpush.bf16.xpose.msra.mxu0 0
    %476 = vmatpush.bf16.xpose.msra.mxu0 0
    %477 = vmatpush.bf16.xpose.msra.mxu0 0
    %478 = vmatpush.bf16.xpose.msra.mxu0 0
    %479 = vmatpush.bf16.xpose.msra.mxu0 0
    %480 = vmatpush.bf16.xpose.msra.mxu0 0
    %481 = vmatpush.bf16.xpose.msra.mxu0 %v397
    %482 = vmatmul.bf16.gmra.mxu0 %v395
    %v483 = vpop.f32.mrf.mxu0
    %v484 = vadd.f32 0.0, %v483
    %v485 = vpop.f32.mrf.mxu0
    %486 = vdwg.mxu0
    %487 = vmatpush.bf16.xpose.msra.mxu0 0
    %488 = vmatpush.bf16.xpose.msra.mxu0 0
    %489 = vmatpush.bf16.xpose.msra.mxu0 0
    %490 = vmatpush.bf16.xpose.msra.mxu0 0
    %491 = vmatpush.bf16.xpose.msra.mxu0 0
    %492 = vmatpush.bf16.xpose.msra.mxu0 0
    %493 = vmatpush.bf16.xpose.msra.mxu0 0
    %494 = vmatpush.bf16.xpose.msra.mxu0 %v403
    %495 = vmatmul.bf16.gmra.mxu0 %v401
    %v496 = vpop.f32.mrf.mxu0
    %v497 = vadd.f32 0.0, %v496
    %v498 = vpop.f32.mrf.mxu0
    %499 = vdwg.mxu0
    %v500 = vmul.f32 %v484, 0.015625
    %v501 = vmul.f32 %v497, 0.015625
    %v503 = vrot.slane %v395, 4
    %v506 = vrot.slane %v397, 4
    %508 = vmatpush.bf16.xpose.msra.mxu0 0
    %509 = vmatpush.bf16.xpose.msra.mxu0 0
    %510 = vmatpush.bf16.xpose.msra.mxu0 0
    %511 = vmatpush.bf16.xpose.msra.mxu0 0
    %512 = vmatpush.bf16.xpose.msra.mxu0 0
    %513 = vmatpush.bf16.xpose.msra.mxu0 0
    %514 = vmatpush.bf16.xpose.msra.mxu0 0
    %515 = vmatpush.bf16.xpose.msra.mxu0 %v506
    %516 = vmatmul.bf16.gmra.mxu0 %v503
    %v517 = vpop.f32.mrf.mxu0
    %v518 = vadd.f32 0.0, %v517
    %v519 = vpop.f32.mrf.mxu0
    %520 = vdwg.mxu0
    %v522 = vrot.slane %v401, 4
    %v525 = vrot.slane %v403, 4
    %527 = vmatpush.bf16.xpose.msra.mxu0 0
    %528 = vmatpush.bf16.xpose.msra.mxu0 0
    %529 = vmatpush.bf16.xpose.msra.mxu0 0
    %530 = vmatpush.bf16.xpose.msra.mxu0 0
    %531 = vmatpush.bf16.xpose.msra.mxu0 0
    %532 = vmatpush.bf16.xpose.msra.mxu0 0
    %533 = vmatpush.bf16.xpose.msra.mxu0 0
    %534 = vmatpush.bf16.xpose.msra.mxu0 %v525
    %535 = vmatmul.bf16.gmra.mxu0 %v522
    %v536 = vpop.f32.mrf.mxu0
    %v537 = vadd.f32 0.0, %v536
    %v538 = vpop.f32.mrf.mxu0
    %539 = vdwg.mxu0
    %v540 = vmul.f32 %v518, 0.015625
    %v541 = vmul.f32 %v537, 0.015625
    %vm542 = vcmask 64512
    %v543 = vsel %vm542, %v432, -inf
    %544 = vmax.xlane.f32.xlu0 %v543
    %v545 = vpop.xlane.xlu0 %544
    %v546 = vsel %vm542, %v433, -inf
    %547 = vmax.xlane.f32.xlu0 %v546
    %v548 = vpop.xlane.xlu0 %547
    %v549 = vsel %vm542, %v472, -inf
    %550 = vmax.xlane.f32.xlu0 %v549
    %v551 = vpop.xlane.xlu0 %550
    %v552 = vsel %vm542, %v473, -inf
    %553 = vmax.xlane.f32.xlu0 %v552
    %v554 = vpop.xlane.xlu0 %553
    %v555 = vsel %vm542, %v500, -inf
    %556 = vmax.xlane.f32.xlu0 %v555
    %v557 = vpop.xlane.xlu0 %556
    %v558 = vsel %vm542, %v501, -inf
    %559 = vmax.xlane.f32.xlu0 %v558
    %v560 = vpop.xlane.xlu0 %559
    %v561 = vsel %vm542, %v540, -inf
    %562 = vmax.xlane.f32.xlu0 %v561
    %v563 = vpop.xlane.xlu0 %562
    %v564 = vsel %vm542, %v541, -inf
    %565 = vmax.xlane.f32.xlu0 %v564
    %v566 = vpop.xlane.xlu0 %565
    %v567 = vsub.f32 %v432, %v545
    %v568 = vsub.f32 %v433, %v548
    %v569 = vsub.f32 %v472, %v551
    %v570 = vsub.f32 %v473, %v554
    %v571 = vsub.f32 %v500, %v557
    %v572 = vsub.f32 %v501, %v560
    %v573 = vsub.f32 %v540, %v563
    %v574 = vsub.f32 %v541, %v566
    %v575 = vmul.f32 %v567, 1.442695
    %v576 = vpow.pop %v575
    %v577 = vmul.f32 %v568, 1.442695
    %v578 = vpow.pop %v577
    %v579 = vmul.f32 %v569, 1.442695
    %v580 = vpow.pop %v579
    %v581 = vmul.f32 %v570, 1.442695
    %v582 = vpow.pop %v581
    %v583 = vmul.f32 %v571, 1.442695
    %v584 = vpow.pop %v583
    %v585 = vmul.f32 %v572, 1.442695
    %v586 = vpow.pop %v585
    %v587 = vmul.f32 %v573, 1.442695
    %v588 = vpow.pop %v587
    %v589 = vmul.f32 %v574, 1.442695
    %v590 = vpow.pop %v589
    %v591 = vsel %vm542, %v576, 0.0
    %592 = vadd.xlane.f32.xlu0 %v591
    %v593 = vpop.xlane.xlu0 %592
    %v594 = vsel %vm542, %v578, 0.0
    %595 = vadd.xlane.f32.xlu0 %v594
    %v596 = vpop.xlane.xlu0 %595
    %v597 = vsel %vm542, %v580, 0.0
    %598 = vadd.xlane.f32.xlu0 %v597
    %v599 = vpop.xlane.xlu0 %598
    %v600 = vsel %vm542, %v582, 0.0
    %601 = vadd.xlane.f32.xlu0 %v600
    %v602 = vpop.xlane.xlu0 %601
    %v603 = vsel %vm542, %v584, 0.0
    %604 = vadd.xlane.f32.xlu0 %v603
    %v605 = vpop.xlane.xlu0 %604
    %v606 = vsel %vm542, %v586, 0.0
    %607 = vadd.xlane.f32.xlu0 %v606
    %v608 = vpop.xlane.xlu0 %607
    %v609 = vsel %vm542, %v588, 0.0
    %610 = vadd.xlane.f32.xlu0 %v609
    %v611 = vpop.xlane.xlu0 %610
    %v612 = vsel %vm542, %v590, 0.0
    %613 = vadd.xlane.f32.xlu0 %v612
    %v614 = vpop.xlane.xlu0 %613
    %v615 = vrcp.pop %v593
    %v616 = vmul.f32 %v593, %v615
    %v617 = vsub.f32 1.0, %v616
    %v618 = vmul.f32 %v615, %v617
    %v619 = vadd.f32 %v615, %v618
    %vm620 = vweird.f32 %v593
    %vm621 = vweird.f32 %v615
    %vm622 = vmor %vm620, %vm621
    %v623 = vsel %vm622, %v615, %v619
    %v624 = vand.u32 2147483647, %v593
    %vm625 = vcmp.eq.f32.partialorder %v624, 8.507059e+37
    %v626 = vand.u32 %v593, 2147483648
    %v627 = vor.u32 1.1754944e-38, %v626
    %v628 = vsel %vm625, %v627, %v623
    %v629 = vrcp.pop %v596
    %v630 = vmul.f32 %v596, %v629
    %v631 = vsub.f32 1.0, %v630
    %v632 = vmul.f32 %v629, %v631
    %v633 = vadd.f32 %v629, %v632
    %vm634 = vweird.f32 %v596
    %vm635 = vweird.f32 %v629
    %vm636 = vmor %vm634, %vm635
    %v637 = vsel %vm636, %v629, %v633
    %v638 = vand.u32 2147483647, %v596
    %vm639 = vcmp.eq.f32.partialorder %v638, 8.507059e+37
    %v640 = vand.u32 %v596, 2147483648
    %v641 = vor.u32 1.1754944e-38, %v640
    %v642 = vsel %vm639, %v641, %v637
    %v643 = vrcp.pop %v599
    %v644 = vmul.f32 %v599, %v643
    %v645 = vsub.f32 1.0, %v644
    %v646 = vmul.f32 %v643, %v645
    %v647 = vadd.f32 %v643, %v646
    %vm648 = vweird.f32 %v599
    %vm649 = vweird.f32 %v643
    %vm650 = vmor %vm648, %vm649
    %v651 = vsel %vm650, %v643, %v647
    %v652 = vand.u32 2147483647, %v599
    %vm653 = vcmp.eq.f32.partialorder %v652, 8.507059e+37
    %v654 = vand.u32 %v599, 2147483648
    %v655 = vor.u32 1.1754944e-38, %v654
    %v656 = vsel %vm653, %v655, %v651
    %v657 = vrcp.pop %v602
    %v658 = vmul.f32 %v602, %v657
    %v659 = vsub.f32 1.0, %v658
    %v660 = vmul.f32 %v657, %v659
    %v661 = vadd.f32 %v657, %v660
    %vm662 = vweird.f32 %v602
    %vm663 = vweird.f32 %v657
    %vm664 = vmor %vm662, %vm663
    %v665 = vsel %vm664, %v657, %v661
    %v666 = vand.u32 2147483647, %v602
    %vm667 = vcmp.eq.f32.partialorder %v666, 8.507059e+37
    %v668 = vand.u32 %v602, 2147483648
    %v669 = vor.u32 1.1754944e-38, %v668
    %v670 = vsel %vm667, %v669, %v665
    %v671 = vrcp.pop %v605
    %v672 = vmul.f32 %v605, %v671
    %v673 = vsub.f32 1.0, %v672
    %v674 = vmul.f32 %v671, %v673
    %v675 = vadd.f32 %v671, %v674
    %vm676 = vweird.f32 %v605
    %vm677 = vweird.f32 %v671
    %vm678 = vmor %vm676, %vm677
    %v679 = vsel %vm678, %v671, %v675
    %v680 = vand.u32 2147483647, %v605
    %vm681 = vcmp.eq.f32.partialorder %v680, 8.507059e+37
    %v682 = vand.u32 %v605, 2147483648
    %v683 = vor.u32 1.1754944e-38, %v682
    %v684 = vsel %vm681, %v683, %v679
    %v685 = vrcp.pop %v608
    %v686 = vmul.f32 %v608, %v685
    %v687 = vsub.f32 1.0, %v686
    %v688 = vmul.f32 %v685, %v687
    %v689 = vadd.f32 %v685, %v688
    %vm690 = vweird.f32 %v608
    %vm691 = vweird.f32 %v685
    %vm692 = vmor %vm690, %vm691
    %v693 = vsel %vm692, %v685, %v689
    %v694 = vand.u32 2147483647, %v608
    %vm695 = vcmp.eq.f32.partialorder %v694, 8.507059e+37
    %v696 = vand.u32 %v608, 2147483648
    %v697 = vor.u32 1.1754944e-38, %v696
    %v698 = vsel %vm695, %v697, %v693
    %v699 = vrcp.pop %v611
    %v700 = vmul.f32 %v611, %v699
    %v701 = vsub.f32 1.0, %v700
    %v702 = vmul.f32 %v699, %v701
    %v703 = vadd.f32 %v699, %v702
    %vm704 = vweird.f32 %v611
    %vm705 = vweird.f32 %v699
    %vm706 = vmor %vm704, %vm705
    %v707 = vsel %vm706, %v699, %v703
    %v708 = vand.u32 2147483647, %v611
    %vm709 = vcmp.eq.f32.partialorder %v708, 8.507059e+37
    %v710 = vand.u32 %v611, 2147483648
    %v711 = vor.u32 1.1754944e-38, %v710
    %v712 = vsel %vm709, %v711, %v707
    %v713 = vrcp.pop %v614
    %v714 = vmul.f32 %v614, %v713
    %v715 = vsub.f32 1.0, %v714
    %v716 = vmul.f32 %v713, %v715
    %v717 = vadd.f32 %v713, %v716
    %vm718 = vweird.f32 %v614
    %vm719 = vweird.f32 %v713
    %vm720 = vmor %vm718, %vm719
    %v721 = vsel %vm720, %v713, %v717
    %v722 = vand.u32 2147483647, %v614
    %vm723 = vcmp.eq.f32.partialorder %v722, 8.507059e+37
    %v724 = vand.u32 %v614, 2147483648
    %v725 = vor.u32 1.1754944e-38, %v724
    %v726 = vsel %vm723, %v725, %v721
    %v727 = vmul.f32 %v576, %v628
    %v728 = vmul.f32 %v578, %v642
    %v729 = vmul.f32 %v580, %v656
    %v730 = vmul.f32 %v582, %v670
    %v731 = vmul.f32 %v584, %v684
    %v732 = vmul.f32 %v586, %v698
    %v733 = vmul.f32 %v588, %v712
    %v734 = vmul.f32 %v590, %v726
    %v735 = vpack.c.bf16 %v727, %v727
    %v736 = vpack.c.bf16 %v728, %v728
    %v737 = vpack.c.bf16 %v729, %v729
    %v738 = vpack.c.bf16 %v730, %v730
    %v739 = vpack.c.bf16 %v731, %v731
    %v740 = vpack.c.bf16 %v732, %v732
    %v741 = vpack.c.bf16 %v733, %v733
    %v742 = vpack.c.bf16 %v734, %v734
    %v744 = vrot.slane %v398, 4
    %v746 = vsel %vm542, %v737, 0
    %vm748 = vcmask 1043456
    %v750 = vsel %vm748, %v744, 0
    %752 = vmatpush.bf16.msra.mxu0 0
    %753 = vmatpush.bf16.msra.mxu0 0
    %754 = vmatpush.bf16.msra.mxu0 0
    %755 = vmatpush.bf16.msra.mxu0 0
    %756 = vmatpush.bf16.msra.mxu0 0
    %757 = vmatpush.bf16.msra.mxu0 0
    %758 = vmatpush.bf16.msra.mxu0 0
    %759 = vmatpush.bf16.msra.mxu0 %v750
    %760 = vmatmul.bf16.gmra.mxu0 %v746
    %v761 = vpop.f32.mrf.mxu0
    %v762 = vadd.f32 0.0, %v761
    %v763 = vpop.f32.mrf.mxu0
    %764 = vdwg.mxu0
    %v766 = vrot.slane %v404, 4
    %v768 = vsel %vm542, %v738, 0
    %v771 = vsel %vm748, %v766, 0
    %773 = vmatpush.bf16.msra.mxu0 0
    %774 = vmatpush.bf16.msra.mxu0 0
    %775 = vmatpush.bf16.msra.mxu0 0
    %776 = vmatpush.bf16.msra.mxu0 0
    %777 = vmatpush.bf16.msra.mxu0 0
    %778 = vmatpush.bf16.msra.mxu0 0
    %779 = vmatpush.bf16.msra.mxu0 0
    %780 = vmatpush.bf16.msra.mxu0 %v771
    %781 = vmatmul.bf16.gmra.mxu0 %v768
    %v782 = vpop.f32.mrf.mxu0
    %v783 = vadd.f32 0.0, %v782
    %v784 = vpop.f32.mrf.mxu0
    %785 = vdwg.mxu0
    %v787 = vsel %vm542, %v735, 0
    %v790 = vsel %vm748, %v398, 0
    %792 = vmatpush.bf16.msra.mxu0 0
    %793 = vmatpush.bf16.msra.mxu0 0
    %794 = vmatpush.bf16.msra.mxu0 0
    %795 = vmatpush.bf16.msra.mxu0 0
    %796 = vmatpush.bf16.msra.mxu0 0
    %797 = vmatpush.bf16.msra.mxu0 0
    %798 = vmatpush.bf16.msra.mxu0 0
    %799 = vmatpush.bf16.msra.mxu0 %v790
    %800 = vmatmul.bf16.gmra.mxu0 %v787
    %v801 = vpop.f32.mrf.mxu0
    %v802 = vadd.f32 %v762, %v801
    %v803 = vpop.f32.mrf.mxu0
    %804 = vdwg.mxu0
    %v806 = vsel %vm542, %v736, 0
    %v809 = vsel %vm748, %v404, 0
    %811 = vmatpush.bf16.msra.mxu0 0
    %812 = vmatpush.bf16.msra.mxu0 0
    %813 = vmatpush.bf16.msra.mxu0 0
    %814 = vmatpush.bf16.msra.mxu0 0
    %815 = vmatpush.bf16.msra.mxu0 0
    %816 = vmatpush.bf16.msra.mxu0 0
    %817 = vmatpush.bf16.msra.mxu0 0
    %818 = vmatpush.bf16.msra.mxu0 %v809
    %819 = vmatmul.bf16.gmra.mxu0 %v806
    %v820 = vpop.f32.mrf.mxu0
    %v821 = vadd.f32 %v783, %v820
    %v822 = vpop.f32.mrf.mxu0
    %823 = vdwg.mxu0
    %v825 = vsel %vm542, %v739, 0
    %v828 = vsel %vm748, %v399, 0
    %830 = vmatpush.bf16.msra.mxu0 0
    %831 = vmatpush.bf16.msra.mxu0 0
    %832 = vmatpush.bf16.msra.mxu0 0
    %833 = vmatpush.bf16.msra.mxu0 0
    %834 = vmatpush.bf16.msra.mxu0 0
    %835 = vmatpush.bf16.msra.mxu0 0
    %836 = vmatpush.bf16.msra.mxu0 0
    %837 = vmatpush.bf16.msra.mxu0 %v828
    %838 = vmatmul.bf16.gmra.mxu0 %v825
    %v839 = vpop.f32.mrf.mxu0
    %v840 = vadd.f32 0.0, %v839
    %v841 = vpop.f32.mrf.mxu0
    %842 = vdwg.mxu0
    %v844 = vsel %vm542, %v740, 0
    %v847 = vsel %vm748, %v405, 0
    %849 = vmatpush.bf16.msra.mxu0 0
    %850 = vmatpush.bf16.msra.mxu0 0
    %851 = vmatpush.bf16.msra.mxu0 0
    %852 = vmatpush.bf16.msra.mxu0 0
    %853 = vmatpush.bf16.msra.mxu0 0
    %854 = vmatpush.bf16.msra.mxu0 0
    %855 = vmatpush.bf16.msra.mxu0 0
    %856 = vmatpush.bf16.msra.mxu0 %v847
    %857 = vmatmul.bf16.gmra.mxu0 %v844
    %v858 = vpop.f32.mrf.mxu0
    %v859 = vadd.f32 0.0, %v858
    %v860 = vpop.f32.mrf.mxu0
    %861 = vdwg.mxu0
    %v862 = vadd.f32 %v802, %v840
    %v863 = vadd.f32 %v821, %v859
    %v865 = vrot.slane %v399, 4
    %v867 = vsel %vm542, %v741, 0
    %v870 = vsel %vm748, %v865, 0
    %872 = vmatpush.bf16.msra.mxu0 0
    %873 = vmatpush.bf16.msra.mxu0 0
    %874 = vmatpush.bf16.msra.mxu0 0
    %875 = vmatpush.bf16.msra.mxu0 0
    %876 = vmatpush.bf16.msra.mxu0 0
    %877 = vmatpush.bf16.msra.mxu0 0
    %878 = vmatpush.bf16.msra.mxu0 0
    %879 = vmatpush.bf16.msra.mxu0 %v870
    %880 = vmatmul.bf16.gmra.mxu0 %v867
    %v881 = vpop.f32.mrf.mxu0
    %v882 = vadd.f32 0.0, %v881
    %v883 = vpop.f32.mrf.mxu0
    %884 = vdwg.mxu0
    %v886 = vrot.slane %v405, 4
    %v888 = vsel %vm542, %v742, 0
    %v891 = vsel %vm748, %v886, 0
    %893 = vmatpush.bf16.msra.mxu0 0
    %894 = vmatpush.bf16.msra.mxu0 0
    %895 = vmatpush.bf16.msra.mxu0 0
    %896 = vmatpush.bf16.msra.mxu0 0
    %897 = vmatpush.bf16.msra.mxu0 0
    %898 = vmatpush.bf16.msra.mxu0 0
    %899 = vmatpush.bf16.msra.mxu0 0
    %900 = vmatpush.bf16.msra.mxu0 %v891
    %901 = vmatmul.bf16.gmra.mxu0 %v888
    %v902 = vpop.f32.mrf.mxu0
    %v903 = vadd.f32 0.0, %v902
    %v904 = vpop.f32.mrf.mxu0
    %905 = vdwg.mxu0
    %v906 = vadd.f32 %v862, %v882
    %v907 = vadd.f32 %v863, %v903
    %908 = vst.msk [vmem:[#allocation7] sm:$0xff] %vm222, %v906
    %909 = vst.msk [vmem:[#allocation7 + $0x8] sm:$0xff] %vm222, %v907
    // Predicated region
    $region18: #{tpu_custom_call.1} parent=1 // pred_check
      _
    $region19: #{tpu_custom_call.1} parent=1 // pred_check_branch
      %911 = sbr.rel (0) target = $region21
    $region20: #{tpu_custom_call.1} parent=1 // pred_region
      %913 = vsyncadd [#allocation4], 0
      %s914 = sshll.u32 [#allocation7], 4
      %s915 = int_to_ptr.vmem [resolvable:$true] %s914
      %s916 = sshll.u32 %s2, 4
      %s917 = int_to_ptr.hbm [resolvable:$true] %s916
      %922 = dma.vmem_to_hbm [thread:$0]  %s915, 256, %s917, [#allocation4], 128, 128, 8
    $region21: #{tpu_custom_call.1} parent=1 // pred_fallthru
      _
    // Predicated region
    $region22: #{tpu_custom_call.1} parent=1 // pred_check
      _
    $region23: #{tpu_custom_call.1} parent=1 // pred_check_branch
      %924 = sbr.rel (0) target = $region25
    $region24: #{tpu_custom_call.1} parent=1 // pred_region
      %926 = dma.done [#allocation4], 256
    $region25: #{tpu_custom_call.1} parent=1 // pred_fallthru
      _
    %927 = vsyncpa [#allocation3], 1
    %928 = vsyncpa [#allocation6], 1
    %929 = vsyncpa [#allocation4], 1

</llo_original>
